<compile_context>
chip_gen: v7x
topology: tpu7x:2x2x1
jax: 0.10.0
libtpu: 0.0.40
codegen_flags: <defaults>
</compile_context>

<pallas_src>
import math

import jax
import jax.numpy as jnp
import numpy as np
from jax.experimental import pallas as pl
from jax.experimental.pallas import tpu as pltpu

TM = 8  # rows (atoms / bonds) processed per grid step


def _round_up(n, m):
    return (n + m - 1) // m * m


def _pad_rows(x, n_pad):
    n = x.shape[0]
    if n == n_pad:
        return x
    pad = [(0, n_pad - n)] + [(0, 0)] * (x.ndim - 1)
    return jnp.pad(x, pad)


# ---------------------------------------------------------------------------
# Kernel 1: input layer   pre = x @ Wt + b ;  act = relu(pre)
# ---------------------------------------------------------------------------
def _linear_pre_act_kernel(x_ref, wt_ref, b_ref, pre_ref, act_ref):
    acc = jnp.dot(x_ref[...], wt_ref[...], preferred_element_type=jnp.float32)
    acc = acc + b_ref[...].astype(jnp.float32)
    pre_ref[...] = acc.astype(pre_ref.dtype)
    act_ref[...] = jnp.maximum(acc, 0.0).astype(act_ref.dtype)


def linear_pre_act(x, w_t, b):
    n, k = x.shape
    h = w_t.shape[1]
    assert n % TM == 0
    return pl.pallas_call(
        _linear_pre_act_kernel,
        out_shape=(jax.ShapeDtypeStruct((n, h), x.dtype),
                   jax.ShapeDtypeStruct((n, h), x.dtype)),
        grid=(n // TM,),
        in_specs=[
            pl.BlockSpec((TM, k), lambda i: (i, 0)),
            pl.BlockSpec((k, h), lambda i: (0, 0)),
            pl.BlockSpec((1, h), lambda i: (0, 0)),
        ],
        out_specs=(
            pl.BlockSpec((TM, h), lambda i: (i, 0)),
            pl.BlockSpec((TM, h), lambda i: (i, 0)),
        ),
        compiler_params=pltpu.CompilerParams(dimension_semantics=("parallel",)),
    )(x, w_t, b)


# ---------------------------------------------------------------------------
# Kernel 2: gather + sum over neighbours  (index_select_ND(feat, idx).sum(1))
#           out[i] = sum_j feat[idx[i, j]]     (one-hot counts @ feat on MXU)
# ---------------------------------------------------------------------------
def _gather_sum_kernel(idx_ref, feat_ref, o_ref):
    idx = idx_ref[...]                                    # [TM, max_nei] int32
    tm, max_nei = idx.shape
    n_src = feat_ref.shape[0]
    src = jax.lax.broadcasted_iota(jnp.int32, (tm, n_src), 1)
    onehot = jnp.zeros((tm, n_src), jnp.float32)
    for j in range(max_nei):                              # small, static unroll
        onehot = onehot + (idx[:, j:j + 1] == src).astype(jnp.float32)
    o_ref[...] = jnp.dot(onehot, feat_ref[...],
                         preferred_element_type=jnp.float32).astype(o_ref.dtype)


def gather_sum(feat, idx):
    """out[i] = sum_j feat[idx[i, j]]  (select_neighbor_and_aggregate)."""
    s, f = feat.shape
    m, k = idx.shape
    assert m % TM == 0
    return pl.pallas_call(
        _gather_sum_kernel,
        out_shape=jax.ShapeDtypeStruct((m, f), feat.dtype),
        grid=(m // TM,),
        in_specs=[
            pl.BlockSpec((TM, k), lambda i: (i, 0)),
            pl.BlockSpec((s, f), lambda i: (0, 0)),
        ],
        out_specs=pl.BlockSpec((TM, f), lambda i: (i, 0)),
        compiler_params=pltpu.CompilerParams(dimension_semantics=("parallel",)),
    )(idx, feat)


# ---------------------------------------------------------------------------
# Kernel 3: fused  relu([res +] cat(x1, x2) @ W.T + b)  with W pre-split
# ---------------------------------------------------------------------------
def _combine2_kernel(x1_ref, x2_ref, w1_ref, w2_ref, b_ref, o_ref):
    acc = jnp.dot(x1_ref[...], w1_ref[...], preferred_element_type=jnp.float32)
    acc = acc + jnp.dot(x2_ref[...], w2_ref[...], preferred_element_type=jnp.float32)
    acc = acc + b_ref[...].astype(jnp.float32)
    o_ref[...] = jnp.maximum(acc, 0.0).astype(o_ref.dtype)


def _combine2_res_kernel(x1_ref, x2_ref, w1_ref, w2_ref, b_ref, res_ref, o_ref):
    acc = jnp.dot(x1_ref[...], w1_ref[...], preferred_element_type=jnp.float32)
    acc = acc + jnp.dot(x2_ref[...], w2_ref[...], preferred_element_type=jnp.float32)
    acc = acc + b_ref[...].astype(jnp.float32) + res_ref[...].astype(jnp.float32)
    o_ref[...] = jnp.maximum(acc, 0.0).astype(o_ref.dtype)


def combine2_act(x1, x2, w1_t, w2_t, b, res=None):
    """relu([res +] concat(x1, x2, axis=1) @ W.T + b) with W pre-split/transposed."""
    n, k1 = x1.shape
    k2 = x2.shape[1]
    h = w1_t.shape[1]
    assert n % TM == 0
    in_specs = [
        pl.BlockSpec((TM, k1), lambda i: (i, 0)),
        pl.BlockSpec((TM, k2), lambda i: (i, 0)),
        pl.BlockSpec((k1, h), lambda i: (0, 0)),
        pl.BlockSpec((k2, h), lambda i: (0, 0)),
        pl.BlockSpec((1, h), lambda i: (0, 0)),
    ]
    args = [x1, x2, w1_t, w2_t, b]
    kernel = _combine2_kernel
    if res is not None:
        in_specs.append(pl.BlockSpec((TM, h), lambda i: (i, 0)))
        args.append(res)
        kernel = _combine2_res_kernel
    return pl.pallas_call(
        kernel,
        out_shape=jax.ShapeDtypeStruct((n, h), x1.dtype),
        grid=(n // TM,),
        in_specs=in_specs,
        out_specs=pl.BlockSpec((TM, h), lambda i: (i, 0)),
        compiler_params=pltpu.CompilerParams(dimension_semantics=("parallel",)),
    )(*args)


# ---------------------------------------------------------------------------
# MPNPlusEncoder (JAX/Pallas port, forward / inference semantics)
# ---------------------------------------------------------------------------
class MPNPlusEncoder:
    def __init__(self, atom_fea_dim, bond_fea_fdim, hidden_size, bias, depth,
                 dropout, undirected, dense, aggregate_to_atom, attach_fea,
                 activation, input_layer='fc', key=None):
        if input_layer != 'fc':
            # TODO(synk): GraphConvolution ('gcn') input layer (torch.spmm) not ported.
            raise NotImplementedError("only input_layer='fc' is implemented")
        if attach_fea:
            # TODO(synk): attach_fea=True (extra attached-feature concat) not ported.
            raise NotImplementedError("attach_fea=True is not implemented")
        if activation != 'ReLU':
            # TODO(synk): only ReLU activation ported.
            raise NotImplementedError("only ReLU activation is implemented")

        self.atom_fea_dim = atom_fea_dim
        self.bond_fea_fdim = bond_fea_fdim
        self.hidden_size = hidden_size
        self.bias = bias
        self.depth = depth
        # TODO(synk): training-mode dropout not implemented; forward == eval mode.
        self.dropout = dropout
        self.undirected = undirected
        self.dense = dense
        self.aggregate_to_atom = aggregate_to_atom
        self.attach_fea = attach_fea

        H = hidden_size
        ks = jax.random.split(key, 12)

        def linear_init(kw, kb, out_f, in_f, use_bias):
            bound = 1.0 / math.sqrt(in_f)
            w = jax.random.uniform(kw, (out_f, in_f), jnp.float32, -bound, bound)
            if use_bias:
                b = jax.random.uniform(kb, (out_f,), jnp.float32, -bound, bound)
            else:
                b = jnp.zeros((out_f,), jnp.float32)
            return w, b

        self.W_nin, self.b_nin = linear_init(ks[0], ks[1], H, atom_fea_dim, bias)
        self.W_ein, self.b_ein = linear_init(ks[2], ks[3], H, bond_fea_fdim, bias)
        self.W_node, self.b_node = linear_init(ks[4], ks[5], H, 2 * H, bias)
        self.W_edge, self.b_edge = linear_init(ks[6], ks[7], H, 2 * H, bias)
        # W_nout / W_eout are plain nn.Linear (bias always on in the PyTorch code)
        self.W_nout, self.b_nout = linear_init(ks[8], ks[9], H, atom_fea_dim + H, True)
        self.W_eout, self.b_eout = linear_init(ks[10], ks[11], H, atom_fea_dim + H, True)

    def __call__(self, atom_features, bond_features, a2a, a2b, b2a, b2revb):
        H = self.hidden_size
        A = self.atom_fea_dim
        na = atom_features.shape[0]
        nb = bond_features.shape[0]
        na_p = _round_up(na, TM)
        nb_p = _round_up(nb, TM)

        # pad row counts once; real indices never address padded rows
        af = _pad_rows(atom_features, na_p)
        bf = _pad_rows(bond_features, nb_p)
        a2a_p = _pad_rows(a2a.astype(jnp.int32), na_p)
        a2b_p = _pad_rows(a2b.astype(jnp.int32), na_p)
        b2a_p = _pad_rows(b2a.astype(jnp.int32)[:, None], nb_p)
        b2revb_p = _pad_rows(b2revb.astype(jnp.int32)[:, None], nb_p)
        b2a_revb_p = _pad_rows(b2a[b2revb].astype(jnp.int32)[:, None], nb_p)

        # pre-transposed / pre-split weights -> canonical MXU contraction in-kernel
        Wnin_t = self.W_nin.T
        Wein_t = self.W_ein.T
        Wn1_t, Wn2_t = self.W_node[:, :H].T, self.W_node[:, H:].T
        We1_t, We2_t = self.W_edge[:, :H].T, self.W_edge[:, H:].T
        Wnout_a_t, Wnout_m_t = self.W_nout[:, :A].T, self.W_nout[:, A:].T
        Weout_a_t, Weout_m_t = self.W_eout[:, :A].T, self.W_eout[:, A:].T
        b_nin, b_ein = self.b_nin[None], self.b_ein[None]
        b_node, b_edge = self.b_node[None], self.b_edge[None]
        b_nout, b_eout = self.b_nout[None], self.b_eout[None]

        # input layers (pre-activation kept: it is the residual when dense=False)
        atom_input, atom_message = linear_pre_act(af, Wnin_t, b_nin)
        bond_input, bond_message = linear_pre_act(bf, Wein_t, b_ein)

        for _ in range(self.depth - 1):
            # -------- atom-centred hop (one_hop, atom_messages=True) --------
            msg = atom_message
            if self.undirected:
                # only well-formed when message rows == len(b2revb) (bond messages)
                msg = 0.5 * (msg + gather_sum(msg, b2revb_p))
            nei_msg = gather_sum(msg, a2a_p)            # sum of neighbour atom msgs
            nei_att = gather_sum(bond_message, a2b_p)   # sum of incident bond msgs
            atom_message = combine2_act(
                nei_msg, nei_att, Wn1_t, Wn2_t, b_node,
                res=None if self.dense else atom_input)

            # -------- bond-centred hop (one_hop, atom_messages=False) --------
            msg = bond_message
            if self.undirected:
                msg = 0.5 * (msg + gather_sum(msg, b2revb_p))
            nei_msg = gather_sum(msg, a2b_p)            # per-atom sum of bond msgs
            nei_att = gather_sum(atom_message, a2a_p)   # per-atom sum of atom msgs
            g1 = gather_sum(nei_msg, b2a_p)             # a_message[b2a]  (part 1)
            g2 = gather_sum(nei_att, b2a_p)             # a_message[b2a]  (part 2)
            g3 = gather_sum(msg, b2revb_p)              # message[b2revb]
            g4 = gather_sum(atom_message, b2a_revb_p)   # attached_message[b2a[b2revb]]
            # message = a_message[b2a] - rev_message, split along the concat axis
            bond_message = combine2_act(
                g1 - g3, g2 - g4, We1_t, We2_t, b_edge,
                res=None if self.dense else bond_input)

        if self.aggregate_to_atom:
            a_msg = gather_sum(atom_message, a2a_p)
            atom_out = combine2_act(af, a_msg, Wnout_a_t, Wnout_m_t, b_nout)
            b_msg = gather_sum(bond_message, a2b_p)
            bond_out = combine2_act(af, b_msg, Weout_a_t, Weout_m_t, b_eout)
            return atom_out[:na], bond_out[:na]
        return atom_message[:na], bond_message[:nb]


# ---------------------------------------------------------------------------
# pure-JAX reference (mirrors the PyTorch forward) for the correctness check
# ---------------------------------------------------------------------------
def ref_forward(enc, atom_features, bond_features, a2a, a2b, b2a, b2revb):
    relu = lambda v: jnp.maximum(v, 0.0)
    lin = lambda x, w, b: x @ w.T + b
    gsum = lambda feat, idx: feat[idx].sum(axis=1)

    atom_input = lin(atom_features, enc.W_nin, enc.b_nin)
    bond_input = lin(bond_features, enc.W_ein, enc.b_ein)
    atom_message = relu(atom_input)
    bond_message = relu(bond_input)

    for _ in range(enc.depth - 1):
        # atom hop
        a_msg = jnp.concatenate([gsum(atom_message, a2a),
                                 gsum(bond_message, a2b)], axis=1)
        m = lin(a_msg, enc.W_node, enc.b_node)
        atom_message = relu(m if enc.dense else atom_input + m)
        # bond hop
        a_msg = jnp.concatenate([gsum(bond_message, a2b),
                                 gsum(atom_message, a2a)], axis=1)
        rev = jnp.concatenate([bond_message[b2revb],
                               atom_message[b2a[b2revb]]], axis=1)
        m = lin(a_msg[b2a] - rev, enc.W_edge, enc.b_edge)
        bond_message = relu(m if enc.dense else bond_input + m)

    if enc.aggregate_to_atom:
        am = gsum(atom_message, a2a)
        atom_out = relu(lin(jnp.concatenate([atom_features, am], 1),
                            enc.W_nout, enc.b_nout))
        bm = gsum(bond_message, a2b)
        bond_out = relu(lin(jnp.concatenate([atom_features, bm], 1),
                            enc.W_eout, enc.b_eout))
        return atom_out, bond_out
    return atom_message, bond_message


if __name__ == "__main__":
    key = jax.random.PRNGKey(0)
    k_af, k_bf, k_par = jax.random.split(key, 3)

    ATOM_FDIM, BOND_FDIM, HIDDEN, DEPTH = 32, 16, 128, 3

    # small chain molecule in chemprop layout (row 0 of atoms/bonds = zero padding)
    n_real_atoms = 9
    edges = [(i, i + 1) for i in range(1, n_real_atoms)]        # atoms 1..9
    n_atoms = n_real_atoms + 1
    n_bonds = 2 * len(edges) + 1
    b2a_np = np.zeros((n_bonds,), np.int32)
    b2revb_np = np.zeros((n_bonds,), np.int32)
    a2b_list = [[] for _ in range(n_atoms)]
    bid = 1
    for u, v in edges:
        b2a_np[bid], b2a_np[bid + 1] = u, v
        b2revb_np[bid], b2revb_np[bid + 1] = bid + 1, bid
        a2b_list[v].append(bid)          # bond u->v arrives at atom v
        a2b_list[u].append(bid + 1)      # bond v->u arrives at atom u
        bid += 2
    max_nbr = max(len(l) for l in a2b_list)
    a2b_np = np.zeros((n_atoms, max_nbr), np.int32)
    for a, l in enumerate(a2b_list):
        a2b_np[a, :len(l)] = l
    a2a_np = b2a_np[a2b_np]              # neighbour atoms (origins of incoming bonds)

    atom_features = jax.random.normal(k_af, (n_atoms, ATOM_FDIM), jnp.float32)
    atom_features = atom_features.at[0].set(0.0)     # padding atom row
    bond_features = jax.random.normal(k_bf, (n_bonds, BOND_FDIM), jnp.float32)
    bond_features = bond_features.at[0].set(0.0)     # padding bond row

    a2a = jnp.asarray(a2a_np)
    a2b = jnp.asarray(a2b_np)
    b2a = jnp.asarray(b2a_np)
    b2revb = jnp.asarray(b2revb_np)

    enc = MPNPlusEncoder(
        atom_fea_dim=ATOM_FDIM, bond_fea_fdim=BOND_FDIM, hidden_size=HIDDEN,
        bias=True, depth=DEPTH, dropout=0.0, undirected=False, dense=False,
        aggregate_to_atom=True, attach_fea=False, activation='ReLU',
        input_layer='fc', key=k_par)

    atom_out, bond_out = enc(atom_features, bond_features, a2a, a2b, b2a, b2revb)
    atom_out, bond_out = jax.block_until_ready((atom_out, bond_out))

    ref_atom, ref_bond = ref_forward(enc, atom_features, bond_features,
                                     a2a, a2b, b2a, b2revb)

    assert atom_out.shape == (n_atoms, HIDDEN)
    assert bond_out.shape == (n_atoms, HIDDEN)
    assert jnp.allclose(atom_out, ref_atom, atol=1e-3, rtol=1e-3), \
        float(jnp.max(jnp.abs(atom_out - ref_atom)))
    assert jnp.allclose(bond_out, ref_bond, atol=1e-3, rtol=1e-3), \
        float(jnp.max(jnp.abs(bond_out - ref_bond)))

    print("KERNEL_OK")
</pallas_src>

<mosaic_0001>
module attributes {stable_mosaic.version = 11 : i64} {
  func.func @_linear_pre_act_kernel(%arg0: i32, %arg1: memref<8x32xf32, #tpu.memory_space<vmem>>, %arg2: memref<32x128xf32, #tpu.memory_space<vmem>>, %arg3: memref<1x128xf32, #tpu.memory_space<vmem>>, %arg4: memref<8x128xf32, #tpu.memory_space<vmem>>, %arg5: memref<8x128xf32, #tpu.memory_space<vmem>>) attributes {dimension_semantics = [#tpu.dimension_semantics<parallel>], iteration_bounds = array<i64: 2>, scalar_prefetch = 0 : i64, scratch_operands = 0 : i64, tpu.core_type = #tpu.core_type<tc>, window_params = [{transform_indices = @transform_0, window_bounds = array<i64: 8, 32>}, {pipeline_mode = #tpu.pipeline_mode<synchronous>, transform_indices = @transform_1, window_bounds = array<i64: 32, 128>}, {pipeline_mode = #tpu.pipeline_mode<synchronous>, transform_indices = @transform_2, window_bounds = array<i64: 1, 128>}, {transform_indices = @transform_3, window_bounds = array<i64: 8, 128>}, {transform_indices = @transform_4, window_bounds = array<i64: 8, 128>}]} {
    %c0 = arith.constant 0 : index
    %c0_0 = arith.constant 0 : index
    %0 = vector.load %arg1[%c0, %c0_0] : memref<8x32xf32, #tpu.memory_space<vmem>>, vector<8x32xf32>
    %c0_1 = arith.constant 0 : index
    %c0_2 = arith.constant 0 : index
    %1 = vector.load %arg2[%c0_1, %c0_2] : memref<32x128xf32, #tpu.memory_space<vmem>>, vector<32x128xf32>
    %cst = arith.constant dense<0.000000e+00> : vector<8x128xf32>
    %2 = tpu.matmul %0, %1, %cst {dimension_numbers = #tpu.dot_dimension_numbers<[1], [0], [0], [1], [0, 0, 1, 1], [], []>} : vector<8x32xf32>, vector<32x128xf32>, vector<8x128xf32> -> vector<8x128xf32>
    %c0_3 = arith.constant 0 : index
    %c0_4 = arith.constant 0 : index
    %3 = vector.load %arg3[%c0_3, %c0_4] : memref<1x128xf32, #tpu.memory_space<vmem>>, vector<1x128xf32>
    %4 = vector.broadcast %3 : vector<1x128xf32> to vector<8x128xf32>
    %5 = arith.addf %2, %4 : vector<8x128xf32>
    %c0_5 = arith.constant 0 : index
    %c0_6 = arith.constant 0 : index
    %6 = vector.load %arg4[%c0_5, %c0_6] : memref<8x128xf32, #tpu.memory_space<vmem>>, vector<8x128xf32>
    tpu.vector_store %arg4[%c0_5, %c0_6], %5 {strides = array<i32>} : memref<8x128xf32, #tpu.memory_space<vmem>>, vector<8x128xf32>,
    %cst_7 = arith.constant 0.000000e+00 : f32
    %7 = vector.broadcast %cst_7 : f32 to vector<8x128xf32>
    %8 = arith.maximumf %5, %7 : vector<8x128xf32>
    %c0_8 = arith.constant 0 : index
    %c0_9 = arith.constant 0 : index
    %9 = vector.load %arg5[%c0_8, %c0_9] : memref<8x128xf32, #tpu.memory_space<vmem>>, vector<8x128xf32>
    tpu.vector_store %arg5[%c0_8, %c0_9], %8 {strides = array<i32>} : memref<8x128xf32, #tpu.memory_space<vmem>>, vector<8x128xf32>,
    return
  }
  func.func @transform_0(%arg0: i32) -> (i32, i32) {
    %c0_i32 = arith.constant 0 : i32
    %c0_i32_0 = arith.constant 0 : i32
    return %arg0, %c0_i32 : i32, i32
  }
  func.func @transform_1(%arg0: i32) -> (i32, i32) {
    %c0_i32 = arith.constant 0 : i32
    %c0_i32_0 = arith.constant 0 : i32
    %c0_i32_1 = arith.constant 0 : i32
    return %c0_i32, %c0_i32_0 : i32, i32
  }
  func.func @transform_2(%arg0: i32) -> (i32, i32) {
    %c0_i32 = arith.constant 0 : i32
    %c0_i32_0 = arith.constant 0 : i32
    %c0_i32_1 = arith.constant 0 : i32
    return %c0_i32, %c0_i32_0 : i32, i32
  }
  func.func @transform_3(%arg0: i32) -> (i32, i32) {
    %c0_i32 = arith.constant 0 : i32
    %c0_i32_0 = arith.constant 0 : i32
    return %arg0, %c0_i32 : i32, i32
  }
  func.func @transform_4(%arg0: i32) -> (i32, i32) {
    %c0_i32 = arith.constant 0 : i32
    %c0_i32_0 = arith.constant 0 : i32
    return %arg0, %c0_i32 : i32, i32
  }
}

</mosaic_0001>

<llo_original>
// kernel: tpu_custom_call.1
$region0: #{tpu_custom_call.1}
  #allocation0 [shape = 'u32[]', space=smem, size = 0x4, offset = 0x4, fixed_abs, tag = 'smem constant byte address 0x4 - core index']
  #allocation1 [shape = 'u32[144,128]{1,0:T(1,128)}', space=vmem, size = 0x12000, scoped, tag = 'internal scratch']
  %s0 = inlined_call_operand.hbm [shape: f32[16,32], index: 0, kind: input, shape index: {}]
  %s1 = inlined_call_operand.hbm [shape: f32[32,128], index: 1, kind: input, shape index: {}]
  %s2 = inlined_call_operand.vmem [shape: f32[1,128], index: 2, kind: input, shape index: {}]
  %s3 = inlined_call_operand.hbm [shape: f32[16,128], index: 3, kind: output, shape index: {0}]
  %s4 = inlined_call_operand.hbm [shape: f32[16,128], index: 4, kind: output, shape index: {1}]
  %5 = xla_tuple %s3, %s4
  %s6 = sld [smem:[#allocation0]]
  $region61: #{tpu_custom_call.1} parent=0
    _
  %s8 = ssub.s32 1, %s6
  %s9 = scalar_select 0, %s8, %s6
  $region1: #{tpu_custom_call.1} parent=0
    #allocation2 [shape = 'u8[8192]{0}', space=vmem, size = 0x2000, scoped, tag = 'input window, operand 0']
    #allocation3 [shape = 's32[2]{0}', space=sflag, size = 0x8, scoped, tag = 'scoped memory for tpu_custom_call.1']
    #allocation4 [shape = 's32[2]{0}', space=sflag, size = 0x8, scoped, tag = 'scoped memory for tpu_custom_call.1']
    #allocation5 [shape = 'u8[16384]{0}', space=vmem, size = 0x4000, scoped, tag = 'input window, operand 1, single buffered']
    #allocation6 [shape = 's32[1]{0}', space=sflag, size = 0x4, scoped, tag = 'scoped memory for tpu_custom_call.1']
    #allocation7 [shape = 'u8[8192]{0}', space=vmem, size = 0x2000, scoped, tag = 'output window, operand 0']
    #allocation8 [shape = 'u8[8192]{0}', space=vmem, size = 0x2000, scoped, tag = 'output window, operand 1']
    #allocation9 [shape = 's32[2]{0}', space=sflag, size = 0x8, scoped, tag = 'scoped memory for tpu_custom_call.1']
    %10 = vsyncpa [#allocation3], 0
    %s11 = scalar_lea.sflag [#allocation3], 1
    %12 = vsyncpa %s11, 0
    %13 = vsyncpa [#allocation6], 0
    %14 = vsyncpa [#allocation4], 0
    %s15 = scalar_lea.sflag [#allocation4], 1
    %16 = vsyncpa %s15, 0
    %17 = vsyncpa [#allocation9], 0
    %s18 = scalar_lea.sflag [#allocation9], 1
    %19 = vsyncpa %s18, 0
    loop: start=0, step=1, limit=4
    $region2: #{tpu_custom_call.1} parent=1 // loop_pre_header
      _
    $region3: #{tpu_custom_call.1} parent=1 // loop_header
      %s21 = sphi 0, %s25
      %p22 = scmp.ge.s32.totalorder %s21, 4
      %s31 = sphi 0, %s33
      %s34 = sphi 0, %s31
      %s35 = sphi 0, %s34
      %s51 = sphi 0, %s35
      %s55 = sphi 0, %s55
      %s57 = sphi 0, %s55
      %s58 = sphi 0, %s57
      %s72 = sphi 0, %s58
      %s76 = sphi 0, %s76
      %s78 = sphi 0, %s76
      %s79 = sphi 0, %s78
      %s93 = sphi 0, %s79
      %s99 = sphi 0, %s101
      %s102 = sphi 0, %s99
      %s103 = sphi 0, %s102
      %s119 = sphi 0, %s103
      %s125 = sphi 0, %s127
      %s128 = sphi 0, %s125
      %s129 = sphi 0, %s128
      %s145 = sphi 0, %s129
    $region4: #{tpu_custom_call.1} parent=1 // loop_header_branch
      %24 = sbr.rel (%p22) target = $region8
    $region5: #{tpu_custom_call.1} parent=1 // loop_body
      %s26 = ssub.s32 %s21, 1
      %s27 = ssub.s32 %s21, 2
      %s28 = sadd.s32 %s21, 1
      %s29 = ssub.s32 %s21, %s28
      %p30 = scmp.eq.s32.totalorder %s29, 0
      %s32 = sadd.s32 %s31, 1
      %s33 = scalar_select %p30, %s31, %s32
      %p36 = pneg %p30
      %p37 = scmp.eq.s32.totalorder %s21, 1
      %p38 = por %p36, %p37
      %p39 = scmp.ne.s32.totalorder %s31, %s34
      %p40 = scmp.eq.s32.totalorder %s21, 0
      %p41 = por %p39, %p40
      %p42 = scmp.ne.s32.totalorder %s31, %s34
      %p43 = scmp.eq.s32.totalorder %s26, 1
      %p44 = por %p42, %p43
      %p45 = scmp.ne.s32.totalorder %s34, %s35
      %p46 = scmp.eq.s32.totalorder %s26, 0
      %p47 = por %p45, %p46
      %p48 = scmp.ne.s32.totalorder %s34, %s35
      %p49 = scmp.eq.s32.totalorder %s27, 1
      %p50 = por %p48, %p49
      %p52 = scmp.ne.s32.totalorder %s35, %s51
      %p53 = scmp.eq.s32.totalorder %s27, 0
      %p54 = por %p52, %p53
      %s56 = sadd.s32 %s55, 1
      %p59 = scmp.eq.s32.totalorder %s21, 1
      %p60 = scmp.ne.s32.totalorder %s55, %s57
      %p61 = scmp.eq.s32.totalorder %s21, 0
      %p62 = por %p60, %p61
      %p63 = scmp.ne.s32.totalorder %s55, %s57
      %p64 = scmp.eq.s32.totalorder %s26, 1
      %p65 = por %p63, %p64
      %p66 = scmp.ne.s32.totalorder %s57, %s58
      %p67 = scmp.eq.s32.totalorder %s26, 0
      %p68 = por %p66, %p67
      %p69 = scmp.ne.s32.totalorder %s57, %s58
      %p70 = scmp.eq.s32.totalorder %s27, 1
      %p71 = por %p69, %p70
      %p73 = scmp.ne.s32.totalorder %s58, %s72
      %p74 = scmp.eq.s32.totalorder %s27, 0
      %p75 = por %p73, %p74
      %s77 = sadd.s32 %s76, 1
      %p80 = scmp.eq.s32.totalorder %s21, 1
      %p81 = scmp.ne.s32.totalorder %s76, %s78
      %p82 = scmp.eq.s32.totalorder %s21, 0
      %p83 = por %p81, %p82
      %p84 = scmp.ne.s32.totalorder %s76, %s78
      %p85 = scmp.eq.s32.totalorder %s26, 1
      %p86 = por %p84, %p85
      %p87 = scmp.ne.s32.totalorder %s78, %s79
      %p88 = scmp.eq.s32.totalorder %s26, 0
      %p89 = por %p87, %p88
      %p90 = scmp.ne.s32.totalorder %s78, %s79
      %p91 = scmp.eq.s32.totalorder %s27, 1
      %p92 = por %p90, %p91
      %p94 = scmp.ne.s32.totalorder %s79, %s93
      %p95 = scmp.eq.s32.totalorder %s27, 0
      %p96 = por %p94, %p95
      %s97 = ssub.s32 %s21, %s28
      %p98 = scmp.eq.s32.totalorder %s97, 0
      %s100 = sadd.s32 %s99, 1
      %s101 = scalar_select %p98, %s99, %s100
      %p104 = pneg %p98
      %p105 = scmp.eq.s32.totalorder %s21, 1
      %p106 = por %p104, %p105
      %p107 = scmp.ne.s32.totalorder %s99, %s102
      %p108 = scmp.eq.s32.totalorder %s21, 0
      %p109 = por %p107, %p108
      %p110 = scmp.ne.s32.totalorder %s99, %s102
      %p111 = scmp.eq.s32.totalorder %s26, 1
      %p112 = por %p110, %p111
      %p113 = scmp.ne.s32.totalorder %s102, %s103
      %p114 = scmp.eq.s32.totalorder %s26, 0
      %p115 = por %p113, %p114
      %p116 = scmp.ne.s32.totalorder %s102, %s103
      %p117 = scmp.eq.s32.totalorder %s27, 1
      %p118 = por %p116, %p117
      %p120 = scmp.ne.s32.totalorder %s103, %s119
      %p121 = scmp.eq.s32.totalorder %s27, 0
      %p122 = por %p120, %p121
      %s123 = ssub.s32 %s21, %s28
      %p124 = scmp.eq.s32.totalorder %s123, 0
      %s126 = sadd.s32 %s125, 1
      %s127 = scalar_select %p124, %s125, %s126
      %p130 = pneg %p124
      %p131 = scmp.eq.s32.totalorder %s21, 1
      %p132 = por %p130, %p131
      %p133 = scmp.ne.s32.totalorder %s125, %s128
      %p134 = scmp.eq.s32.totalorder %s21, 0
      %p135 = por %p133, %p134
      %p136 = scmp.ne.s32.totalorder %s125, %s128
      %p137 = scmp.eq.s32.totalorder %s26, 1
      %p138 = por %p136, %p137
      %p139 = scmp.ne.s32.totalorder %s128, %s129
      %p140 = scmp.eq.s32.totalorder %s26, 0
      %p141 = por %p139, %p140
      %p142 = scmp.ne.s32.totalorder %s128, %s129
      %p143 = scmp.eq.s32.totalorder %s27, 1
      %p144 = por %p142, %p143
      %p146 = scmp.ne.s32.totalorder %s129, %s145
      %p147 = scmp.eq.s32.totalorder %s27, 0
      %p148 = por %p146, %p147
      %p149 = scmp.le.s32.totalorder 1, %s21
      %p150 = scmp.lt.s32.totalorder %s21, 3
      %p151 = pnand %p149, %p150
      %p152 = pneg %p151
      // Predicated region
      $region9: #{tpu_custom_call.1} parent=5 // pred_check
        _
      $region10: #{tpu_custom_call.1} parent=5 // pred_check_branch
        %154 = sbr.rel (%p151) target = $region12
      $region11: #{tpu_custom_call.1} parent=5 // pred_region
        %s155 = ssub.s32 %s21, 1
        // Predicated region
        $region13: #{tpu_custom_call.1} parent=11 // pred_check
          %p156 = pneg %p68
        $region14: #{tpu_custom_call.1} parent=11 // pred_check_branch
          %158 = sbr.rel (%p156) target = $region16
        $region15: #{tpu_custom_call.1} parent=11 // pred_region
          %s160 = ssub.s32 512, 512
          %161 = vsyncadd [#allocation6], %s160
          %s162 = sshll.u32 [#allocation5], 4
          %s163 = int_to_ptr.vmem [resolvable:$true] %s162
          %168 = dma.hbm_to_vmem [thread:$0]  %s1, 512, %s163, [#allocation6], 128, 128, 8
        $region16: #{tpu_custom_call.1} parent=11 // pred_fallthru
          _
        // Predicated region
        $region17: #{tpu_custom_call.1} parent=11 // pred_check
          %p169 = pneg %p89
        $region18: #{tpu_custom_call.1} parent=11 // pred_check_branch
          %171 = sbr.rel (%p169) target = $region20
        $region19: #{tpu_custom_call.1} parent=11 // pred_region
          _
        $region20: #{tpu_custom_call.1} parent=11 // pred_fallthru
          _
      $region12: #{tpu_custom_call.1} parent=5 // pred_fallthru
        _
      %p172 = scmp.lt.s32.totalorder %s21, 2
      // Predicated region
      $region21: #{tpu_custom_call.1} parent=5 // pred_check
        %p173 = pneg %p172
      $region22: #{tpu_custom_call.1} parent=5 // pred_check_branch
        %175 = sbr.rel (%p173) target = $region24
      $region23: #{tpu_custom_call.1} parent=5 // pred_region
        // Predicated region
        $region25: #{tpu_custom_call.1} parent=23 // pred_check
          %p176 = pneg %p41
        $region26: #{tpu_custom_call.1} parent=23 // pred_check_branch
          %178 = sbr.rel (%p176) target = $region28
        $region27: #{tpu_custom_call.1} parent=23 // pred_region
          %s179 = sand.u32 %s31, 1
          %s180 = scalar_lea.sflag [#allocation3], %s179
          %s181 = sand.u32 %s31, 1
          %s182 = smul.addr %s181, 8
          %s183 = scalar_lea.vmem [#allocation2], %s182
          %s185 = ssub.s32 128, 128
          %186 = vsyncadd %s180, %s185
          %s187 = smul.addr %s21, 128
          %s188 = scalar_lea.hbm %s0, %s187
          %s190 = sshll.u32 %s183, 4
          %s191 = int_to_ptr.vmem [resolvable:$true] %s190
          %193 = dma.hbm_to_vmem [thread:$0]  %s188, 128, %s191, %s180
        $region28: #{tpu_custom_call.1} parent=23 // pred_fallthru
          _
      $region24: #{tpu_custom_call.1} parent=5 // pred_fallthru
        _
      %p194 = scmp.le.s32.totalorder 1, %s21
      %p195 = scmp.lt.s32.totalorder %s21, 3
      %p196 = pnand %p194, %p195
      %p197 = pneg %p196
      // Predicated region
      $region29: #{tpu_custom_call.1} parent=5 // pred_check
        _
      $region30: #{tpu_custom_call.1} parent=5 // pred_check_branch
        %199 = sbr.rel (%p196) target = $region32
      $region31: #{tpu_custom_call.1} parent=5 // pred_region
        %s200 = ssub.s32 %s21, 1
        %s201 = sand.u32 %s34, 1
        %s202 = scalar_lea.sflag [#allocation3], %s201
        %s203 = sand.u32 %s34, 1
        %s204 = smul.addr %s203, 8
        %s205 = scalar_lea.vmem [#allocation2], %s204
        // Predicated region
        $region33: #{tpu_custom_call.1} parent=31 // pred_check
          %p206 = pneg %p47
        $region34: #{tpu_custom_call.1} parent=31 // pred_check_branch
          %208 = sbr.rel (%p206) target = $region36
        $region35: #{tpu_custom_call.1} parent=31 // pred_region
          %209 = dma.done %s202, 128
        $region36: #{tpu_custom_call.1} parent=31 // pred_fallthru
          _
        // Predicated region
        $region37: #{tpu_custom_call.1} parent=31 // pred_check
          %p210 = pneg %p68
        $region38: #{tpu_custom_call.1} parent=31 // pred_check_branch
          %212 = sbr.rel (%p210) target = $region40
        $region39: #{tpu_custom_call.1} parent=31 // pred_region
          %213 = dma.done [#allocation6], 512
        $region40: #{tpu_custom_call.1} parent=31 // pred_fallthru
          _
        %s214 = sand.u32 %s34, 1
        %s215 = scalar_lea.sflag [#allocation3], %s214
        %s216 = sand.u32 %s34, 1
        %s217 = smul.addr %s216, 8
        %s218 = scalar_lea.vmem [#allocation2], %s217
        %p219 = pneg %p47
        %p220 = pneg %p44
        %p221 = pneg %p68
        %p222 = pneg %p65
        %p223 = pneg %p89
        %p224 = pneg %p86
        %p225 = pneg %p115
        %p226 = pneg %p112
        %s227 = sand.u32 %s102, 1
        %s228 = scalar_lea.sflag [#allocation4], %s227
        %s229 = sand.u32 %s102, 1
        %s230 = smul.addr %s229, 8
        %s231 = scalar_lea.vmem [#allocation7], %s230
        %p232 = pneg %p141
        %p233 = pneg %p138
        %s234 = sand.u32 %s128, 1
        %s235 = scalar_lea.sflag [#allocation9], %s234
        %s236 = sand.u32 %s128, 1
        %s237 = smul.addr %s236, 8
        %s238 = scalar_lea.vmem [#allocation8], %s237
        %v239 = vld [vmem:[%s205] sm:$0xff]
        %v240 = vld [vmem:[#allocation5] sm:$0xff]
        %v241 = vld [vmem:[#allocation5 + $0x8] sm:$0xff]
        %v242 = vld [vmem:[#allocation5 + $0x10] sm:$0xff]
        %v243 = vld [vmem:[#allocation5 + $0x18] sm:$0xff]
        %v244 = vld [vmem:[%s2] sm:$0x1]
        %v246 = vlaneseq
        %v247 = vshrl.u32 %v246, 7
        %v248 = vsub.s32 0, %v247
        %v249 = vrot.slane %v244, %v248
        %vm251 = vcmask 261120
        %v253 = vsel %vm251, %v239, 0
        %255 = vmatprep.subr.mxu0 0.0
        %256 = vmatpush1.msra.mxu0 %v240
        %257 = vmatprep.subr.mxu0 0.0
        %258 = vmatpush1.msra.mxu0 %v241
        %259 = vmatprep.subr.mxu0 0.0
        %260 = vmatpush1.msra.mxu0 %v242
        %261 = vmatprep.subr.mxu0 0.0
        %262 = vmatpush1.msra.mxu0 %v243
        %263 = vmatprep.subr.mxu0 0.0
        %264 = vmatpush1.msra.mxu0 0.0
        %265 = vmatprep.subr.mxu0 0.0
        %266 = vmatpush1.msra.mxu0 0.0
        %267 = vmatprep.subr.mxu0 0.0
        %268 = vmatpush1.msra.mxu0 0.0
        %269 = vmatprep.subr.mxu0 0.0
        %270 = vmatpush1.msra.mxu0 0.0
        %271 = vmatprep.subr.mxu0 0.0
        %272 = vmatpush1.msra.mxu0 0.0
        %273 = vmatprep.subr.mxu0 0.0
        %274 = vmatpush1.msra.mxu0 0.0
        %275 = vmatprep.subr.mxu0 0.0
        %276 = vmatpush1.msra.mxu0 0.0
        %277 = vmatprep.subr.mxu0 0.0
        %278 = vmatpush1.msra.mxu0 0.0
        %279 = vmatprep.subr.mxu0 0.0
        %280 = vmatpush1.msra.mxu0 0.0
        %281 = vmatprep.subr.mxu0 0.0
        %282 = vmatpush1.msra.mxu0 0.0
        %283 = vmatprep.subr.mxu0 0.0
        %284 = vmatpush1.msra.mxu0 0.0
        %285 = vmatprep.subr.mxu0 0.0
        %286 = vmatpush1.msra.mxu0 0.0
        %287 = vmatprep.subr.mxu0 0.0
        %288 = vmatpush1.msra.mxu0 0.0
        %289 = vmatprep.subr.mxu0 0.0
        %290 = vmatpush1.msra.mxu0 0.0
        %291 = vmatprep.subr.mxu0 0.0
        %292 = vmatpush1.msra.mxu0 0.0
        %293 = vmatprep.subr.mxu0 0.0
        %294 = vmatpush1.msra.mxu0 0.0
        %295 = vmatprep.subr.mxu0 0.0
        %296 = vmatpush1.msra.mxu0 0.0
        %297 = vmatprep.subr.mxu0 0.0
        %298 = vmatpush1.msra.mxu0 0.0
        %299 = vmatprep.subr.mxu0 0.0
        %300 = vmatpush1.msra.mxu0 0.0
        %301 = vmatprep.subr.mxu0 0.0
        %302 = vmatpush1.msra.mxu0 0.0
        %303 = vmatprep.subr.mxu0 0.0
        %304 = vmatpush1.msra.mxu0 0.0
        %305 = vmatprep.subr.mxu0 0.0
        %306 = vmatpush1.msra.mxu0 0.0
        %307 = vmatprep.subr.mxu0 0.0
        %308 = vmatpush1.msra.mxu0 0.0
        %309 = vmatprep.subr.mxu0 0.0
        %310 = vmatpush1.msra.mxu0 0.0
        %311 = vmatprep.subr.mxu0 0.0
        %312 = vmatpush1.msra.mxu0 0.0
        %313 = vmatprep.subr.mxu0 0.0
        %314 = vmatpush1.msra.mxu0 0.0
        %315 = vmatprep.subr.mxu0 0.0
        %316 = vmatpush1.msra.mxu0 0.0
        %317 = vmatprep.subr.mxu0 0.0
        %318 = vmatpush1.msra.mxu0 0.0
        %319 = vmatprep.mubr.f32.mxu0 0.0
        %320 = vmatmul.mubr.f32.gmra.mrb[0].mxu0 %v253
        %v321 = vpop.f32.mrb[0].mxu0
        %v322 = vadd.f32 %v249, %v321
        %v323 = vpop.f32.mrb[0].mxu0
        %324 = vdwg.mxu0
        %325 = vst [vmem:[%s231] sm:$0xff] %v322
        %v326 = vmax.f32 %v322, 0.0
        %327 = vst [vmem:[%s238] sm:$0xff] %v326
        %s328 = sand.u32 %s102, 1
        %s329 = scalar_lea.sflag [#allocation4], %s328
        %s330 = sand.u32 %s102, 1
        %s331 = smul.addr %s330, 8
        %s332 = scalar_lea.vmem [#allocation7], %s331
        %s333 = sand.u32 %s128, 1
        %s334 = scalar_lea.sflag [#allocation9], %s333
        %s335 = sand.u32 %s128, 1
        %s336 = smul.addr %s335, 8
        %s337 = scalar_lea.vmem [#allocation8], %s336
        // Predicated region
        $region41: #{tpu_custom_call.1} parent=31 // pred_check
          %p338 = pneg %p112
        $region42: #{tpu_custom_call.1} parent=31 // pred_check_branch
          %340 = sbr.rel (%p338) target = $region44
        $region43: #{tpu_custom_call.1} parent=31 // pred_region
          %s342 = ssub.s32 128, 128
          %343 = vsyncadd %s329, %s342
          %s344 = smul.addr %s26, 128
          %s345 = scalar_lea.hbm %s3, %s344
          %s347 = sshll.u32 %s332, 4
          %s348 = int_to_ptr.vmem [resolvable:$true] %s347
          %350 = dma.vmem_to_hbm [thread:$0]  %s348, 128, %s345, %s329
        $region44: #{tpu_custom_call.1} parent=31 // pred_fallthru
          _
        // Predicated region
        $region45: #{tpu_custom_call.1} parent=31 // pred_check
          %p351 = pneg %p138
        $region46: #{tpu_custom_call.1} parent=31 // pred_check_branch
          %353 = sbr.rel (%p351) target = $region48
        $region47: #{tpu_custom_call.1} parent=31 // pred_region
          %s355 = ssub.s32 128, 128
          %356 = vsyncadd %s334, %s355
          %s357 = smul.addr %s26, 128
          %s358 = scalar_lea.hbm %s4, %s357
          %s360 = sshll.u32 %s337, 4
          %s361 = int_to_ptr.vmem [resolvable:$true] %s360
          %363 = dma.vmem_to_hbm [thread:$0]  %s361, 128, %s358, %s334
        $region48: #{tpu_custom_call.1} parent=31 // pred_fallthru
          _
      $region32: #{tpu_custom_call.1} parent=5 // pred_fallthru
        _
      %p364 = scmp.le.s32.totalorder 2, %s21
      // Predicated region
      $region49: #{tpu_custom_call.1} parent=5 // pred_check
        %p365 = pneg %p364
      $region50: #{tpu_custom_call.1} parent=5 // pred_check_branch
        %367 = sbr.rel (%p365) target = $region52
      $region51: #{tpu_custom_call.1} parent=5 // pred_region
        %s368 = ssub.s32 %s21, 2
        // Predicated region
        $region53: #{tpu_custom_call.1} parent=51 // pred_check
          %p369 = pneg %p118
        $region54: #{tpu_custom_call.1} parent=51 // pred_check_branch
          %371 = sbr.rel (%p369) target = $region56
        $region55: #{tpu_custom_call.1} parent=51 // pred_region
          %s372 = sand.u32 %s103, 1
          %s373 = scalar_lea.sflag [#allocation4], %s372
          %s374 = sand.u32 %s103, 1
          %s375 = smul.addr %s374, 8
          %s376 = scalar_lea.vmem [#allocation7], %s375
          %377 = dma.done %s373, 128
        $region56: #{tpu_custom_call.1} parent=51 // pred_fallthru
          _
        // Predicated region
        $region57: #{tpu_custom_call.1} parent=51 // pred_check
          %p378 = pneg %p144
        $region58: #{tpu_custom_call.1} parent=51 // pred_check_branch
          %380 = sbr.rel (%p378) target = $region60
        $region59: #{tpu_custom_call.1} parent=51 // pred_region
          %s381 = sand.u32 %s129, 1
          %s382 = scalar_lea.sflag [#allocation9], %s381
          %s383 = sand.u32 %s129, 1
          %s384 = smul.addr %s383, 8
          %s385 = scalar_lea.vmem [#allocation8], %s384
          %386 = dma.done %s382, 128
        $region60: #{tpu_custom_call.1} parent=51 // pred_fallthru
          _
      $region52: #{tpu_custom_call.1} parent=5 // pred_fallthru
        _
    $region6: #{tpu_custom_call.1} parent=1 // loop_footer
      %s25 = sadd.s32 1, %s21
    $region7: #{tpu_custom_call.1} parent=1 // loop_footer_branch
      %20 = sbr.rel target = $region3
    $region8: #{tpu_custom_call.1} parent=1 // loop_exit
      _
    %387 = vsyncpa [#allocation3], 1
    %s388 = scalar_lea.sflag [#allocation3], 1
    %389 = vsyncpa %s388, 1
    %390 = vsyncpa [#allocation6], 1
    %391 = vsyncpa [#allocation4], 1
    %s392 = scalar_lea.sflag [#allocation4], 1
    %393 = vsyncpa %s392, 1
    %394 = vsyncpa [#allocation9], 1
    %s395 = scalar_lea.sflag [#allocation9], 1
    %396 = vsyncpa %s395, 1

</llo_original>
